<compile_context>
chip_gen: v7x
topology: tpu7x:2x2x1
jax: 0.10.0
libtpu: 0.0.40
codegen_flags: <defaults>
</compile_context>

<pallas_src>
import jax
import jax.numpy as jnp
import numpy as np
from jax.experimental import pallas as pl
from jax.experimental.pallas import tpu as pltpu

LANE = 128          # lane width (last-dim granularity for lane-dense output)
ROW_GRAN = 16       # batch-tile row granularity (covers bf16 sublane packing; >= 8 for f32)


def _round_up(x, m):
    return (x + m - 1) // m * m


def _is_multi_tensorcore_chip():
    """True on chips with >1 TensorCore per chip (v7x) where CORE_PARALLEL pays off."""
    try:
        kind = jax.devices()[0].device_kind.lower()
    except Exception:
        return False
    return ("v7" in kind) or ("7x" in kind)


def actor_kernel(x_ref, w1_ref, b1_ref, w2_ref, b2_ref, w3_ref, b3_ref, o_ref):
    x = x_ref[...]                       # (TB, state_dim) in the compute dtype
    w1 = w1_ref[...]                     # (state_dim, H)
    w2 = w2_ref[...]                     # (H, H)
    w3 = w3_ref[...]                     # (H, N_pad)
    cdt = w1.dtype
    if x.dtype != cdt:                   # static check; no-op on the fast path
        x = x.astype(cdt)

    # fc1 + ReLU: MXU matmul in compute dtype with f32 accumulation; bias add
    # and ReLU stay f32 (v5e-safe elementwise path).
    h1 = jnp.dot(x, w1, preferred_element_type=jnp.float32) + b1_ref[...]
    h1 = jnp.maximum(h1, 0.0)
    # fc2 + ReLU
    h2 = jnp.dot(h1.astype(cdt), w2, preferred_element_type=jnp.float32) + b2_ref[...]
    h2 = jnp.maximum(h2, 0.0)
    # fc3 + tanh (tanh lands on the EUP slot -> effectively free)
    h3 = jnp.dot(h2.astype(cdt), w3, preferred_element_type=jnp.float32) + b3_ref[...]
    o_ref[...] = jnp.tanh(h3).astype(o_ref.dtype)


def init_actor_params(key, state_dim, action_dim, hidden=256):
    """PyTorch nn.Linear default init: U(-1/sqrt(fan_in), 1/sqrt(fan_in)).

    Weights are stored transposed vs. PyTorch, i.e. (in_features, out_features),
    biases as (1, out_features)."""
    ks = jax.random.split(key, 6)

    def linear(kw, kb, fan_in, fan_out):
        bound = 1.0 / np.sqrt(fan_in)
        w = jax.random.uniform(kw, (fan_in, fan_out), jnp.float32, -bound, bound)
        b = jax.random.uniform(kb, (1, fan_out), jnp.float32, -bound, bound)
        return w, b

    w1, b1 = linear(ks[0], ks[1], state_dim, hidden)
    w2, b2 = linear(ks[2], ks[3], hidden, hidden)
    w3, b3 = linear(ks[4], ks[5], hidden, action_dim)
    return {"w1": w1, "b1": b1, "w2": w2, "b2": b2, "w3": w3, "b3": b3}


def prepare_actor_params(params, compute_dtype=jnp.bfloat16):
    """Cast weights to the MXU compute dtype and zero-pad fc3's output axis to a
    full 128-lane vreg (lane-dense output stores).  Biases stay f32 (elementwise
    path).  The fc1 input axis (state_dim) is intentionally NOT padded -- the
    kernel dots the unpadded state directly.  Call once, reuse per forward."""
    w1, b1, w2, b2, w3, b3 = (params[k] for k in ("w1", "b1", "w2", "b2", "w3", "b3"))
    state_dim, hidden = w1.shape
    action_dim = w3.shape[1]
    assert hidden % LANE == 0, "hidden width must be a multiple of 128"

    n_pad = _round_up(action_dim, LANE)
    w1p = w1.astype(compute_dtype)
    w2p = w2.astype(compute_dtype)
    w3p = jnp.pad(w3, ((0, 0), (0, n_pad - action_dim))).astype(compute_dtype)
    b3p = jnp.pad(b3, ((0, 0), (0, n_pad - action_dim))).astype(jnp.float32)

    return {
        "w1": w1p, "b1": b1.astype(jnp.float32),
        "w2": w2p, "b2": b2.astype(jnp.float32),
        "w3": w3p, "b3": b3p,
        "state_dim": state_dim, "action_dim": action_dim,
    }


def actor_forward(state, prepared, *, block_b=1024):
    """state: (B, state_dim) f32; prepared: output of prepare_actor_params.

    Batch-tiled grid (weights resident in VMEM across grid steps); returns
    (B, action_dim) f32 actions in [-1, 1]."""
    w1, b1, w2, b2, w3, b3 = (prepared[k] for k in ("w1", "b1", "w2", "b2", "w3", "b3"))
    state_dim = prepared["state_dim"]
    action_dim = prepared["action_dim"]
    n_pad = w3.shape[1]

    B = state.shape[0]
    core_parallel = _is_multi_tensorcore_chip()

    # Tile the batch with minimal padding: split B into ~cdiv(B, block_b) tiles
    # (>= 2 on multi-TC chips so CORE_PARALLEL has work to shard), each rounded
    # up to the 16-row granularity (bf16-safe; also a multiple of the f32 sublane).
    min_tiles = 2 if (core_parallel and B >= 2 * ROW_GRAN) else 1
    n_tiles = max(pl.cdiv(B, block_b), min_tiles)
    tb = _round_up(pl.cdiv(B, n_tiles), ROW_GRAN)
    grid_b = pl.cdiv(B, tb)
    b_pad = grid_b * tb

    # Cast to the compute dtype once in the wrapper (halves input DMA bytes on
    # the bf16 path and removes the per-tile VPU cast); pad only the batch rows.
    x = state.astype(w1.dtype)
    if b_pad != B:
        x = jnp.pad(x, ((0, b_pad - B), (0, 0)))

    out = pl.pallas_call(
        actor_kernel,
        out_shape=jax.ShapeDtypeStruct((b_pad, n_pad), jnp.float32),
        grid=(grid_b,),
        in_specs=[
            pl.BlockSpec((tb, state_dim), lambda i: (i, 0)),   # state: batch-tiled, unpadded K
            pl.BlockSpec(w1.shape, lambda i: (0, 0)),          # weights/biases: VMEM-resident
            pl.BlockSpec(b1.shape, lambda i: (0, 0)),
            pl.BlockSpec(w2.shape, lambda i: (0, 0)),
            pl.BlockSpec(b2.shape, lambda i: (0, 0)),
            pl.BlockSpec(w3.shape, lambda i: (0, 0)),
            pl.BlockSpec(b3.shape, lambda i: (0, 0)),
        ],
        out_specs=pl.BlockSpec((tb, n_pad), lambda i: (i, 0)),
        compiler_params=pltpu.CompilerParams(
            # Only CORE_PARALLEL actually splits the grid across v7x's two TCs;
            # on single-TC chips keep "parallel" (harmless, measured no-op).
            dimension_semantics=(
                pltpu.CORE_PARALLEL if core_parallel else "parallel",),
        ),
    )(x, w1, b1, w2, b2, w3, b3)

    return out[:B, :action_dim]


def actor_forward_ref(state, params):
    h1 = jnp.maximum(state @ params["w1"] + params["b1"], 0.0)
    h2 = jnp.maximum(h1 @ params["w2"] + params["b2"], 0.0)
    return jnp.tanh(h2 @ params["w3"] + params["b3"])


if __name__ == "__main__":
    key = jax.random.PRNGKey(0)
    k_params, k_s1, k_s2 = jax.random.split(key, 3)

    state_dim, action_dim = 16, 8
    params = init_actor_params(k_params, state_dim, action_dim)

    # 1) f32 compute path, tiny batch: tight match against the PyTorch math.
    state_small = jax.random.normal(k_s1, (8, state_dim), jnp.float32)
    prep_f32 = prepare_actor_params(params, compute_dtype=jnp.float32)
    out_f32 = jax.block_until_ready(actor_forward(state_small, prep_f32))
    ref_small = jax.block_until_ready(actor_forward_ref(state_small, params))
    np.testing.assert_allclose(np.asarray(out_f32), np.asarray(ref_small),
                               atol=1e-5, rtol=1e-5)

    # 2) bf16 fast path, non-multiple batch: exercises minimal-padding tile
    #    selection (B=300, block_b=128 -> tb=112, grid=(3,)) and the resident
    #    weight pipelining.
    state_big = jax.random.normal(k_s2, (300, state_dim), jnp.float32)
    prep_bf16 = prepare_actor_params(params, compute_dtype=jnp.bfloat16)
    out_bf16 = jax.block_until_ready(actor_forward(state_big, prep_bf16, block_b=128))
    ref_big = jax.block_until_ready(actor_forward_ref(state_big, params))
    np.testing.assert_allclose(np.asarray(out_bf16), np.asarray(ref_big),
                               atol=2e-2, rtol=2e-2)

    print("KERNEL_OK")
</pallas_src>

<mosaic_0001>
module attributes {stable_mosaic.version = 11 : i64} {
  func.func @actor_kernel(%arg0: i32, %arg1: memref<16x16xf32, #tpu.memory_space<vmem>>, %arg2: memref<16x256xf32, #tpu.memory_space<vmem>>, %arg3: memref<1x256xf32, #tpu.memory_space<vmem>>, %arg4: memref<256x256xf32, #tpu.memory_space<vmem>>, %arg5: memref<1x256xf32, #tpu.memory_space<vmem>>, %arg6: memref<256x128xf32, #tpu.memory_space<vmem>>, %arg7: memref<1x128xf32, #tpu.memory_space<vmem>>, %arg8: memref<16x128xf32, #tpu.memory_space<vmem>>) attributes {dimension_semantics = [#tpu.dimension_semantics<parallel>], iteration_bounds = array<i64: 1>, scalar_prefetch = 0 : i64, scratch_operands = 0 : i64, tpu.core_type = #tpu.core_type<tc>, window_params = [{transform_indices = @transform_0, window_bounds = array<i64: 16, 16>}, {pipeline_mode = #tpu.pipeline_mode<synchronous>, transform_indices = @transform_1, window_bounds = array<i64: 16, 256>}, {pipeline_mode = #tpu.pipeline_mode<synchronous>, transform_indices = @transform_2, window_bounds = array<i64: 1, 256>}, {pipeline_mode = #tpu.pipeline_mode<synchronous>, transform_indices = @transform_3, window_bounds = array<i64: 256, 256>}, {pipeline_mode = #tpu.pipeline_mode<synchronous>, transform_indices = @transform_4, window_bounds = array<i64: 1, 256>}, {pipeline_mode = #tpu.pipeline_mode<synchronous>, transform_indices = @transform_5, window_bounds = array<i64: 256, 128>}, {pipeline_mode = #tpu.pipeline_mode<synchronous>, transform_indices = @transform_6, window_bounds = array<i64: 1, 128>}, {transform_indices = @transform_7, window_bounds = array<i64: 16, 128>}]} {
    %c0 = arith.constant 0 : index
    %c0_0 = arith.constant 0 : index
    %0 = vector.load %arg1[%c0, %c0_0] : memref<16x16xf32, #tpu.memory_space<vmem>>, vector<16x16xf32>
    %c0_1 = arith.constant 0 : index
    %c0_2 = arith.constant 0 : index
    %1 = vector.load %arg2[%c0_1, %c0_2] : memref<16x256xf32, #tpu.memory_space<vmem>>, vector<16x256xf32>
    %c0_3 = arith.constant 0 : index
    %c0_4 = arith.constant 0 : index
    %2 = vector.load %arg4[%c0_3, %c0_4] : memref<256x256xf32, #tpu.memory_space<vmem>>, vector<256x256xf32>
    %c0_5 = arith.constant 0 : index
    %c0_6 = arith.constant 0 : index
    %3 = vector.load %arg6[%c0_5, %c0_6] : memref<256x128xf32, #tpu.memory_space<vmem>>, vector<256x128xf32>
    %cst = arith.constant dense<0.000000e+00> : vector<16x256xf32>
    %4 = tpu.matmul %0, %1, %cst {dimension_numbers = #tpu.dot_dimension_numbers<[1], [0], [0], [1], [0, 0, 1, 1], [], []>} : vector<16x16xf32>, vector<16x256xf32>, vector<16x256xf32> -> vector<16x256xf32>
    %c0_7 = arith.constant 0 : index
    %c0_8 = arith.constant 0 : index
    %5 = vector.load %arg3[%c0_7, %c0_8] : memref<1x256xf32, #tpu.memory_space<vmem>>, vector<1x256xf32>
    %6 = vector.broadcast %5 : vector<1x256xf32> to vector<16x256xf32>
    %7 = arith.addf %4, %6 : vector<16x256xf32>
    %cst_9 = arith.constant 0.000000e+00 : f32
    %8 = vector.broadcast %cst_9 : f32 to vector<16x256xf32>
    %9 = arith.maximumf %7, %8 : vector<16x256xf32>
    %cst_10 = arith.constant dense<0.000000e+00> : vector<16x256xf32>
    %10 = tpu.matmul %9, %2, %cst_10 {dimension_numbers = #tpu.dot_dimension_numbers<[1], [0], [0], [1], [0, 0, 1, 1], [], []>} : vector<16x256xf32>, vector<256x256xf32>, vector<16x256xf32> -> vector<16x256xf32>
    %c0_11 = arith.constant 0 : index
    %c0_12 = arith.constant 0 : index
    %11 = vector.load %arg5[%c0_11, %c0_12] : memref<1x256xf32, #tpu.memory_space<vmem>>, vector<1x256xf32>
    %12 = vector.broadcast %11 : vector<1x256xf32> to vector<16x256xf32>
    %13 = arith.addf %10, %12 : vector<16x256xf32>
    %cst_13 = arith.constant 0.000000e+00 : f32
    %14 = vector.broadcast %cst_13 : f32 to vector<16x256xf32>
    %15 = arith.maximumf %13, %14 : vector<16x256xf32>
    %cst_14 = arith.constant dense<0.000000e+00> : vector<16x128xf32>
    %16 = tpu.matmul %15, %3, %cst_14 {dimension_numbers = #tpu.dot_dimension_numbers<[1], [0], [0], [1], [0, 0, 1, 1], [], []>} : vector<16x256xf32>, vector<256x128xf32>, vector<16x128xf32> -> vector<16x128xf32>
    %c0_15 = arith.constant 0 : index
    %c0_16 = arith.constant 0 : index
    %17 = vector.load %arg7[%c0_15, %c0_16] : memref<1x128xf32, #tpu.memory_space<vmem>>, vector<1x128xf32>
    %18 = vector.broadcast %17 : vector<1x128xf32> to vector<16x128xf32>
    %19 = arith.addf %16, %18 : vector<16x128xf32>
    %20 = math.tanh %19 : vector<16x128xf32>
    %c0_17 = arith.constant 0 : index
    %c0_18 = arith.constant 0 : index
    %21 = vector.load %arg8[%c0_17, %c0_18] : memref<16x128xf32, #tpu.memory_space<vmem>>, vector<16x128xf32>
    tpu.vector_store %arg8[%c0_17, %c0_18], %20 {strides = array<i32>} : memref<16x128xf32, #tpu.memory_space<vmem>>, vector<16x128xf32>,
    return
  }
  func.func @transform_0(%arg0: i32) -> (i32, i32) {
    %c0_i32 = arith.constant 0 : i32
    %c0_i32_0 = arith.constant 0 : i32
    return %arg0, %c0_i32 : i32, i32
  }
  func.func @transform_1(%arg0: i32) -> (i32, i32) {
    %c0_i32 = arith.constant 0 : i32
    %c0_i32_0 = arith.constant 0 : i32
    %c0_i32_1 = arith.constant 0 : i32
    return %c0_i32, %c0_i32_0 : i32, i32
  }
  func.func @transform_2(%arg0: i32) -> (i32, i32) {
    %c0_i32 = arith.constant 0 : i32
    %c0_i32_0 = arith.constant 0 : i32
    %c0_i32_1 = arith.constant 0 : i32
    return %c0_i32, %c0_i32_0 : i32, i32
  }
  func.func @transform_3(%arg0: i32) -> (i32, i32) {
    %c0_i32 = arith.constant 0 : i32
    %c0_i32_0 = arith.constant 0 : i32
    %c0_i32_1 = arith.constant 0 : i32
    return %c0_i32, %c0_i32_0 : i32, i32
  }
  func.func @transform_4(%arg0: i32) -> (i32, i32) {
    %c0_i32 = arith.constant 0 : i32
    %c0_i32_0 = arith.constant 0 : i32
    %c0_i32_1 = arith.constant 0 : i32
    return %c0_i32, %c0_i32_0 : i32, i32
  }
  func.func @transform_5(%arg0: i32) -> (i32, i32) {
    %c0_i32 = arith.constant 0 : i32
    %c0_i32_0 = arith.constant 0 : i32
    %c0_i32_1 = arith.constant 0 : i32
    return %c0_i32, %c0_i32_0 : i32, i32
  }
  func.func @transform_6(%arg0: i32) -> (i32, i32) {
    %c0_i32 = arith.constant 0 : i32
    %c0_i32_0 = arith.constant 0 : i32
    %c0_i32_1 = arith.constant 0 : i32
    return %c0_i32, %c0_i32_0 : i32, i32
  }
  func.func @transform_7(%arg0: i32) -> (i32, i32) {
    %c0_i32 = arith.constant 0 : i32
    %c0_i32_0 = arith.constant 0 : i32
    return %arg0, %c0_i32 : i32, i32
  }
}

</mosaic_0001>

<llo_original>
// kernel: tpu_custom_call.1
$region0: #{tpu_custom_call.1}
  #allocation0 [shape = 'u32[]', space=smem, size = 0x4, offset = 0x4, fixed_abs, tag = 'smem constant byte address 0x4 - core index']
  #allocation1 [shape = 'u32[144,128]{1,0:T(1,128)}', space=vmem, size = 0x12000, scoped, tag = 'internal scratch']
  %s0 = inlined_call_operand.hbm [shape: f32[16,16], index: 0, kind: input, shape index: {}]
  %s1 = inlined_call_operand.hbm [shape: f32[16,256], index: 1, kind: input, shape index: {}]
  %s2 = inlined_call_operand.vmem [shape: f32[1,256], index: 2, kind: input, shape index: {}]
  %s3 = inlined_call_operand.hbm [shape: f32[256,256], index: 3, kind: input, shape index: {}]
  %s4 = inlined_call_operand.vmem [shape: f32[1,256], index: 4, kind: input, shape index: {}]
  %s5 = inlined_call_operand.hbm [shape: f32[256,128], index: 5, kind: input, shape index: {}]
  %s6 = inlined_call_operand.vmem [shape: f32[1,128], index: 6, kind: input, shape index: {}]
  %s7 = inlined_call_operand.hbm [shape: f32[16,128], index: 7, kind: output, shape index: {}]
  %s8 = sld [smem:[#allocation0]]
  $region54: #{tpu_custom_call.1} parent=0
    _
  %s10 = ssub.s32 1, %s8
  %s11 = scalar_select 0, %s10, %s8
  $region1: #{tpu_custom_call.1} parent=0
    #allocation2 [shape = 'u8[8192]{0}', space=vmem, size = 0x2000, scoped, tag = 'input window, operand 0, single buffered']
    #allocation3 [shape = 's32[1]{0}', space=sflag, size = 0x4, scoped, tag = 'scoped memory for tpu_custom_call.1']
    #allocation4 [shape = 's32[1]{0}', space=sflag, size = 0x4, scoped, tag = 'scoped memory for tpu_custom_call.1']
    #allocation5 [shape = 'u8[16384]{0}', space=vmem, size = 0x4000, scoped, tag = 'input window, operand 1, single buffered']
    #allocation6 [shape = 's32[1]{0}', space=sflag, size = 0x4, scoped, tag = 'scoped memory for tpu_custom_call.1']
    #allocation7 [shape = 'u8[262144]{0}', space=vmem, size = 0x40000, scoped, tag = 'input window, operand 3, single buffered']
    #allocation8 [shape = 'u8[131072]{0}', space=vmem, size = 0x20000, scoped, tag = 'input window, operand 5, single buffered']
    #allocation9 [shape = 's32[1]{0}', space=sflag, size = 0x4, scoped, tag = 'scoped memory for tpu_custom_call.1']
    #allocation10 [shape = 'u8[8192]{0}', space=vmem, size = 0x2000, scoped, tag = 'output window, operand 0, single buffered']
    %12 = vsyncpa [#allocation3], 0
    %13 = vsyncpa [#allocation6], 0
    %14 = vsyncpa [#allocation9], 0
    %15 = vsyncpa [#allocation4], 0
    // Predicated region
    $region2: #{tpu_custom_call.1} parent=1 // pred_check
      _
    $region3: #{tpu_custom_call.1} parent=1 // pred_check_branch
      %17 = sbr.rel (0) target = $region5
    $region4: #{tpu_custom_call.1} parent=1 // pred_region
      %s19 = ssub.s32 256, 256
      %20 = vsyncadd [#allocation3], %s19
      %s21 = sshll.u32 [#allocation2], 4
      %s22 = int_to_ptr.vmem [resolvable:$true] %s21
      %27 = dma.hbm_to_vmem [thread:$0]  %s0, 256, %s22, [#allocation3], 128, 128, 8
    $region5: #{tpu_custom_call.1} parent=1 // pred_fallthru
      _
    // Predicated region
    $region6: #{tpu_custom_call.1} parent=1 // pred_check
      _
    $region7: #{tpu_custom_call.1} parent=1 // pred_check_branch
      %29 = sbr.rel (0) target = $region9
    $region8: #{tpu_custom_call.1} parent=1 // pred_region
      %s31 = ssub.s32 512, 512
      %32 = vsyncadd [#allocation6], %s31
      %s33 = sshll.u32 [#allocation5], 4
      %s34 = int_to_ptr.vmem [resolvable:$true] %s33
      %39 = dma.hbm_to_vmem [thread:$0]  %s1, 512, %s34, [#allocation6], 256, 256, 16
    $region9: #{tpu_custom_call.1} parent=1 // pred_fallthru
      _
    // Predicated region
    $region10: #{tpu_custom_call.1} parent=1 // pred_check
      _
    $region11: #{tpu_custom_call.1} parent=1 // pred_check_branch
      %41 = sbr.rel (0) target = $region13
    $region12: #{tpu_custom_call.1} parent=1 // pred_region
      _
    $region13: #{tpu_custom_call.1} parent=1 // pred_fallthru
      _
    // Predicated region
    $region14: #{tpu_custom_call.1} parent=1 // pred_check
      _
    $region15: #{tpu_custom_call.1} parent=1 // pred_check_branch
      %43 = sbr.rel (0) target = $region17
    $region16: #{tpu_custom_call.1} parent=1 // pred_region
      %s45 = ssub.s32 8192, 8192
      %46 = vsyncadd [#allocation6], %s45
      %s47 = sshll.u32 [#allocation7], 4
      %s48 = int_to_ptr.vmem [resolvable:$true] %s47
      %53 = dma.hbm_to_vmem [thread:$0]  %s3, 8192, %s48, [#allocation6], 256, 256, 16
    $region17: #{tpu_custom_call.1} parent=1 // pred_fallthru
      _
    // Predicated region
    $region18: #{tpu_custom_call.1} parent=1 // pred_check
      _
    $region19: #{tpu_custom_call.1} parent=1 // pred_check_branch
      %55 = sbr.rel (0) target = $region21
    $region20: #{tpu_custom_call.1} parent=1 // pred_region
      _
    $region21: #{tpu_custom_call.1} parent=1 // pred_fallthru
      _
    // Predicated region
    $region22: #{tpu_custom_call.1} parent=1 // pred_check
      _
    $region23: #{tpu_custom_call.1} parent=1 // pred_check_branch
      %57 = sbr.rel (0) target = $region25
    $region24: #{tpu_custom_call.1} parent=1 // pred_region
      %s59 = ssub.s32 4096, 4096
      %60 = vsyncadd [#allocation9], %s59
      %s61 = sshll.u32 [#allocation8], 4
      %s62 = int_to_ptr.vmem [resolvable:$true] %s61
      %67 = dma.hbm_to_vmem [thread:$0]  %s5, 4096, %s62, [#allocation9], 128, 128, 8
    $region25: #{tpu_custom_call.1} parent=1 // pred_fallthru
      _
    // Predicated region
    $region26: #{tpu_custom_call.1} parent=1 // pred_check
      _
    $region27: #{tpu_custom_call.1} parent=1 // pred_check_branch
      %69 = sbr.rel (0) target = $region29
    $region28: #{tpu_custom_call.1} parent=1 // pred_region
      _
    $region29: #{tpu_custom_call.1} parent=1 // pred_fallthru
      _
    // Predicated region
    $region30: #{tpu_custom_call.1} parent=1 // pred_check
      _
    $region31: #{tpu_custom_call.1} parent=1 // pred_check_branch
      %71 = sbr.rel (0) target = $region33
    $region32: #{tpu_custom_call.1} parent=1 // pred_region
      %72 = dma.done [#allocation3], 256
    $region33: #{tpu_custom_call.1} parent=1 // pred_fallthru
      _
    // Predicated region
    $region34: #{tpu_custom_call.1} parent=1 // pred_check
      _
    $region35: #{tpu_custom_call.1} parent=1 // pred_check_branch
      %74 = sbr.rel (0) target = $region37
    $region36: #{tpu_custom_call.1} parent=1 // pred_region
      %75 = dma.done [#allocation6], 512
    $region37: #{tpu_custom_call.1} parent=1 // pred_fallthru
      _
    // Predicated region
    $region38: #{tpu_custom_call.1} parent=1 // pred_check
      _
    $region39: #{tpu_custom_call.1} parent=1 // pred_check_branch
      %77 = sbr.rel (0) target = $region41
    $region40: #{tpu_custom_call.1} parent=1 // pred_region
      %78 = dma.done [#allocation6], 8192
    $region41: #{tpu_custom_call.1} parent=1 // pred_fallthru
      _
    // Predicated region
    $region42: #{tpu_custom_call.1} parent=1 // pred_check
      _
    $region43: #{tpu_custom_call.1} parent=1 // pred_check_branch
      %80 = sbr.rel (0) target = $region45
    $region44: #{tpu_custom_call.1} parent=1 // pred_region
      %81 = dma.done [#allocation9], 4096
    $region45: #{tpu_custom_call.1} parent=1 // pred_fallthru
      _
    %v82 = vld [vmem:[#allocation2] sm:$0xff]
    %v83 = vld [vmem:[#allocation2 + $0x8] sm:$0xff]
    %v84 = vld [vmem:[#allocation5] sm:$0xff]
    %v85 = vld [vmem:[#allocation5 + $0x8] sm:$0xff]
    %v86 = vld [vmem:[#allocation5 + $0x10] sm:$0xff]
    %v87 = vld [vmem:[#allocation5 + $0x18] sm:$0xff]
    %v88 = vld [vmem:[#allocation7] sm:$0xff]
    %v89 = vld [vmem:[#allocation7 + $0x8] sm:$0xff]
    %v90 = vld [vmem:[#allocation7 + $0x10] sm:$0xff]
    %v91 = vld [vmem:[#allocation7 + $0x18] sm:$0xff]
    %v92 = vld [vmem:[#allocation7 + $0x20] sm:$0xff]
    %v93 = vld [vmem:[#allocation7 + $0x28] sm:$0xff]
    %v94 = vld [vmem:[#allocation7 + $0x30] sm:$0xff]
    %v95 = vld [vmem:[#allocation7 + $0x38] sm:$0xff]
    %v96 = vld [vmem:[#allocation7 + $0x40] sm:$0xff]
    %v97 = vld [vmem:[#allocation7 + $0x48] sm:$0xff]
    %v98 = vld [vmem:[#allocation7 + $0x50] sm:$0xff]
    %v99 = vld [vmem:[#allocation7 + $0x58] sm:$0xff]
    %v100 = vld [vmem:[#allocation7 + $0x60] sm:$0xff]
    %v101 = vld [vmem:[#allocation7 + $0x68] sm:$0xff]
    %v102 = vld [vmem:[#allocation7 + $0x70] sm:$0xff]
    %v103 = vld [vmem:[#allocation7 + $0x78] sm:$0xff]
    %v104 = vld [vmem:[#allocation7 + $0x80] sm:$0xff]
    %v105 = vld [vmem:[#allocation7 + $0x88] sm:$0xff]
    %v106 = vld [vmem:[#allocation7 + $0x90] sm:$0xff]
    %v107 = vld [vmem:[#allocation7 + $0x98] sm:$0xff]
    %v108 = vld [vmem:[#allocation7 + $0xa0] sm:$0xff]
    %v109 = vld [vmem:[#allocation7 + $0xa8] sm:$0xff]
    %v110 = vld [vmem:[#allocation7 + $0xb0] sm:$0xff]
    %v111 = vld [vmem:[#allocation7 + $0xb8] sm:$0xff]
    %v112 = vld [vmem:[#allocation7 + $0xc0] sm:$0xff]
    %v113 = vld [vmem:[#allocation7 + $0xc8] sm:$0xff]
    %v114 = vld [vmem:[#allocation7 + $0xd0] sm:$0xff]
    %v115 = vld [vmem:[#allocation7 + $0xd8] sm:$0xff]
    %v116 = vld [vmem:[#allocation7 + $0xe0] sm:$0xff]
    %v117 = vld [vmem:[#allocation7 + $0xe8] sm:$0xff]
    %v118 = vld [vmem:[#allocation7 + $0xf0] sm:$0xff]
    %v119 = vld [vmem:[#allocation7 + $0xf8] sm:$0xff]
    %v120 = vld [vmem:[#allocation7 + $0x100] sm:$0xff]
    %v121 = vld [vmem:[#allocation7 + $0x108] sm:$0xff]
    %v122 = vld [vmem:[#allocation7 + $0x110] sm:$0xff]
    %v123 = vld [vmem:[#allocation7 + $0x118] sm:$0xff]
    %v124 = vld [vmem:[#allocation7 + $0x120] sm:$0xff]
    %v125 = vld [vmem:[#allocation7 + $0x128] sm:$0xff]
    %v126 = vld [vmem:[#allocation7 + $0x130] sm:$0xff]
    %v127 = vld [vmem:[#allocation7 + $0x138] sm:$0xff]
    %v128 = vld [vmem:[#allocation7 + $0x140] sm:$0xff]
    %v129 = vld [vmem:[#allocation7 + $0x148] sm:$0xff]
    %v130 = vld [vmem:[#allocation7 + $0x150] sm:$0xff]
    %v131 = vld [vmem:[#allocation7 + $0x158] sm:$0xff]
    %v132 = vld [vmem:[#allocation7 + $0x160] sm:$0xff]
    %v133 = vld [vmem:[#allocation7 + $0x168] sm:$0xff]
    %v134 = vld [vmem:[#allocation7 + $0x170] sm:$0xff]
    %v135 = vld [vmem:[#allocation7 + $0x178] sm:$0xff]
    %v136 = vld [vmem:[#allocation7 + $0x180] sm:$0xff]
    %v137 = vld [vmem:[#allocation7 + $0x188] sm:$0xff]
    %v138 = vld [vmem:[#allocation7 + $0x190] sm:$0xff]
    %v139 = vld [vmem:[#allocation7 + $0x198] sm:$0xff]
    %v140 = vld [vmem:[#allocation7 + $0x1a0] sm:$0xff]
    %v141 = vld [vmem:[#allocation7 + $0x1a8] sm:$0xff]
    %v142 = vld [vmem:[#allocation7 + $0x1b0] sm:$0xff]
    %v143 = vld [vmem:[#allocation7 + $0x1b8] sm:$0xff]
    %v144 = vld [vmem:[#allocation7 + $0x1c0] sm:$0xff]
    %v145 = vld [vmem:[#allocation7 + $0x1c8] sm:$0xff]
    %v146 = vld [vmem:[#allocation7 + $0x1d0] sm:$0xff]
    %v147 = vld [vmem:[#allocation7 + $0x1d8] sm:$0xff]
    %v148 = vld [vmem:[#allocation7 + $0x1e0] sm:$0xff]
    %v149 = vld [vmem:[#allocation7 + $0x1e8] sm:$0xff]
    %v150 = vld [vmem:[#allocation7 + $0x1f0] sm:$0xff]
    %v151 = vld [vmem:[#allocation7 + $0x1f8] sm:$0xff]
    %v152 = vld [vmem:[#allocation8] sm:$0xff]
    %v153 = vld [vmem:[#allocation8 + $0x8] sm:$0xff]
    %v154 = vld [vmem:[#allocation8 + $0x10] sm:$0xff]
    %v155 = vld [vmem:[#allocation8 + $0x18] sm:$0xff]
    %v156 = vld [vmem:[#allocation8 + $0x20] sm:$0xff]
    %v157 = vld [vmem:[#allocation8 + $0x28] sm:$0xff]
    %v158 = vld [vmem:[#allocation8 + $0x30] sm:$0xff]
    %v159 = vld [vmem:[#allocation8 + $0x38] sm:$0xff]
    %v160 = vld [vmem:[#allocation8 + $0x40] sm:$0xff]
    %v161 = vld [vmem:[#allocation8 + $0x48] sm:$0xff]
    %v162 = vld [vmem:[#allocation8 + $0x50] sm:$0xff]
    %v163 = vld [vmem:[#allocation8 + $0x58] sm:$0xff]
    %v164 = vld [vmem:[#allocation8 + $0x60] sm:$0xff]
    %v165 = vld [vmem:[#allocation8 + $0x68] sm:$0xff]
    %v166 = vld [vmem:[#allocation8 + $0x70] sm:$0xff]
    %v167 = vld [vmem:[#allocation8 + $0x78] sm:$0xff]
    %v168 = vld [vmem:[#allocation8 + $0x80] sm:$0xff]
    %v169 = vld [vmem:[#allocation8 + $0x88] sm:$0xff]
    %v170 = vld [vmem:[#allocation8 + $0x90] sm:$0xff]
    %v171 = vld [vmem:[#allocation8 + $0x98] sm:$0xff]
    %v172 = vld [vmem:[#allocation8 + $0xa0] sm:$0xff]
    %v173 = vld [vmem:[#allocation8 + $0xa8] sm:$0xff]
    %v174 = vld [vmem:[#allocation8 + $0xb0] sm:$0xff]
    %v175 = vld [vmem:[#allocation8 + $0xb8] sm:$0xff]
    %v176 = vld [vmem:[#allocation8 + $0xc0] sm:$0xff]
    %v177 = vld [vmem:[#allocation8 + $0xc8] sm:$0xff]
    %v178 = vld [vmem:[#allocation8 + $0xd0] sm:$0xff]
    %v179 = vld [vmem:[#allocation8 + $0xd8] sm:$0xff]
    %v180 = vld [vmem:[#allocation8 + $0xe0] sm:$0xff]
    %v181 = vld [vmem:[#allocation8 + $0xe8] sm:$0xff]
    %v182 = vld [vmem:[#allocation8 + $0xf0] sm:$0xff]
    %v183 = vld [vmem:[#allocation8 + $0xf8] sm:$0xff]
    %v184 = vld [vmem:[%s2] sm:$0x3]
    %v186 = vlaneseq
    %v187 = vshrl.u32 %v186, 7
    %v188 = vsub.s32 0, %v187
    %v189 = vrot.slane %v184, %v188
    %v190 = vlaneseq
    %v191 = vshrl.u32 %v190, 7
    %v192 = vsub.s32 1, %v191
    %v193 = vrot.slane %v184, %v192
    %vm196 = vcmask 130048
    %v198 = vsel %vm196, %v82, 0
    %v201 = vsel %vm196, %v83, 0
    %203 = vmatprep.subr.mxu0 %v85
    %204 = vmatpush1.msra.mxu0 %v84
    %205 = vmatprep.subr.mxu0 %v87
    %206 = vmatpush1.msra.mxu0 %v86
    %207 = vmatprep.subr.mxu0 0.0
    %208 = vmatpush1.msra.mxu0 0.0
    %209 = vmatprep.subr.mxu0 0.0
    %210 = vmatpush1.msra.mxu0 0.0
    %211 = vmatprep.subr.mxu0 0.0
    %212 = vmatpush1.msra.mxu0 0.0
    %213 = vmatprep.subr.mxu0 0.0
    %214 = vmatpush1.msra.mxu0 0.0
    %215 = vmatprep.subr.mxu0 0.0
    %216 = vmatpush1.msra.mxu0 0.0
    %217 = vmatprep.subr.mxu0 0.0
    %218 = vmatpush1.msra.mxu0 0.0
    %219 = vmatprep.subr.mxu0 0.0
    %220 = vmatpush1.msra.mxu0 0.0
    %221 = vmatprep.subr.mxu0 0.0
    %222 = vmatpush1.msra.mxu0 0.0
    %223 = vmatprep.subr.mxu0 0.0
    %224 = vmatpush1.msra.mxu0 0.0
    %225 = vmatprep.subr.mxu0 0.0
    %226 = vmatpush1.msra.mxu0 0.0
    %227 = vmatprep.subr.mxu0 0.0
    %228 = vmatpush1.msra.mxu0 0.0
    %229 = vmatprep.subr.mxu0 0.0
    %230 = vmatpush1.msra.mxu0 0.0
    %231 = vmatprep.subr.mxu0 0.0
    %232 = vmatpush1.msra.mxu0 0.0
    %233 = vmatprep.subr.mxu0 0.0
    %234 = vmatpush1.msra.mxu0 0.0
    %235 = vmatprep.subr.mxu0 0.0
    %236 = vmatpush1.msra.mxu0 0.0
    %237 = vmatprep.subr.mxu0 0.0
    %238 = vmatpush1.msra.mxu0 0.0
    %239 = vmatprep.subr.mxu0 0.0
    %240 = vmatpush1.msra.mxu0 0.0
    %241 = vmatprep.subr.mxu0 0.0
    %242 = vmatpush1.msra.mxu0 0.0
    %243 = vmatprep.subr.mxu0 0.0
    %244 = vmatpush1.msra.mxu0 0.0
    %245 = vmatprep.subr.mxu0 0.0
    %246 = vmatpush1.msra.mxu0 0.0
    %247 = vmatprep.subr.mxu0 0.0
    %248 = vmatpush1.msra.mxu0 0.0
    %249 = vmatprep.subr.mxu0 0.0
    %250 = vmatpush1.msra.mxu0 0.0
    %251 = vmatprep.subr.mxu0 0.0
    %252 = vmatpush1.msra.mxu0 0.0
    %253 = vmatprep.subr.mxu0 0.0
    %254 = vmatpush1.msra.mxu0 0.0
    %255 = vmatprep.subr.mxu0 0.0
    %256 = vmatpush1.msra.mxu0 0.0
    %257 = vmatprep.subr.mxu0 0.0
    %258 = vmatpush1.msra.mxu0 0.0
    %259 = vmatprep.subr.mxu0 0.0
    %260 = vmatpush1.msra.mxu0 0.0
    %261 = vmatprep.subr.mxu0 0.0
    %262 = vmatpush1.msra.mxu0 0.0
    %263 = vmatprep.subr.mxu0 0.0
    %264 = vmatpush1.msra.mxu0 0.0
    %265 = vmatprep.subr.mxu0 0.0
    %266 = vmatpush1.msra.mxu0 0.0
    %267 = vmatprep.mubr.f32.mxu0 0.0
    %268 = vmatmul.mubr.f32.gmra.mrb[0].mxu0 %v198
    %v269 = vpop.f32.mrb[0].mxu0
    %v270 = vadd.f32 %v189, %v269
    %v271 = vpop.f32.mrb[0].mxu0
    %v272 = vadd.f32 %v193, %v271
    %273 = vmatprep.mubr.f32.mxu0 0.0
    %274 = vmatmul.mubr.f32.gmra.mrb[0].mxu0 %v201
    %v275 = vpop.f32.mrb[0].mxu0
    %v276 = vadd.f32 %v189, %v275
    %v277 = vpop.f32.mrb[0].mxu0
    %v278 = vadd.f32 %v193, %v277
    %279 = vdwg.mxu0
    %v280 = vmax.f32 %v270, 0.0
    %v281 = vmax.f32 %v272, 0.0
    %v282 = vmax.f32 %v276, 0.0
    %v283 = vmax.f32 %v278, 0.0
    %v284 = vld [vmem:[%s4] sm:$0x3]
    %v286 = vlaneseq
    %v287 = vshrl.u32 %v286, 7
    %v288 = vsub.s32 0, %v287
    %v289 = vrot.slane %v284, %v288
    %v290 = vlaneseq
    %v291 = vshrl.u32 %v290, 7
    %v292 = vsub.s32 1, %v291
    %v293 = vrot.slane %v284, %v292
    %296 = vmatprep.subr.mxu0 %v89
    %297 = vmatpush1.msra.mxu0 %v88
    %298 = vmatprep.subr.mxu0 %v91
    %299 = vmatpush1.msra.mxu0 %v90
    %300 = vmatprep.subr.mxu0 %v93
    %301 = vmatpush1.msra.mxu0 %v92
    %302 = vmatprep.subr.mxu0 %v95
    %303 = vmatpush1.msra.mxu0 %v94
    %304 = vmatprep.subr.mxu0 %v97
    %305 = vmatpush1.msra.mxu0 %v96
    %306 = vmatprep.subr.mxu0 %v99
    %307 = vmatpush1.msra.mxu0 %v98
    %308 = vmatprep.subr.mxu0 %v101
    %309 = vmatpush1.msra.mxu0 %v100
    %310 = vmatprep.subr.mxu0 %v103
    %311 = vmatpush1.msra.mxu0 %v102
    %312 = vmatprep.subr.mxu0 %v105
    %313 = vmatpush1.msra.mxu0 %v104
    %314 = vmatprep.subr.mxu0 %v107
    %315 = vmatpush1.msra.mxu0 %v106
    %316 = vmatprep.subr.mxu0 %v109
    %317 = vmatpush1.msra.mxu0 %v108
    %318 = vmatprep.subr.mxu0 %v111
    %319 = vmatpush1.msra.mxu0 %v110
    %320 = vmatprep.subr.mxu0 %v113
    %321 = vmatpush1.msra.mxu0 %v112
    %322 = vmatprep.subr.mxu0 %v115
    %323 = vmatpush1.msra.mxu0 %v114
    %324 = vmatprep.subr.mxu0 %v117
    %325 = vmatpush1.msra.mxu0 %v116
    %326 = vmatprep.subr.mxu0 %v119
    %327 = vmatpush1.msra.mxu0 %v118
    %328 = vmatprep.subr.mxu0 %v121
    %329 = vmatpush1.msra.mxu0 %v120
    %330 = vmatprep.subr.mxu0 %v123
    %331 = vmatpush1.msra.mxu0 %v122
    %332 = vmatprep.subr.mxu0 %v125
    %333 = vmatpush1.msra.mxu0 %v124
    %334 = vmatprep.subr.mxu0 %v127
    %335 = vmatpush1.msra.mxu0 %v126
    %336 = vmatprep.subr.mxu0 %v129
    %337 = vmatpush1.msra.mxu0 %v128
    %338 = vmatprep.subr.mxu0 %v131
    %339 = vmatpush1.msra.mxu0 %v130
    %340 = vmatprep.subr.mxu0 %v133
    %341 = vmatpush1.msra.mxu0 %v132
    %342 = vmatprep.subr.mxu0 %v135
    %343 = vmatpush1.msra.mxu0 %v134
    %344 = vmatprep.subr.mxu0 %v137
    %345 = vmatpush1.msra.mxu0 %v136
    %346 = vmatprep.subr.mxu0 %v139
    %347 = vmatpush1.msra.mxu0 %v138
    %348 = vmatprep.subr.mxu0 %v141
    %349 = vmatpush1.msra.mxu0 %v140
    %350 = vmatprep.subr.mxu0 %v143
    %351 = vmatpush1.msra.mxu0 %v142
    %352 = vmatprep.subr.mxu0 %v145
    %353 = vmatpush1.msra.mxu0 %v144
    %354 = vmatprep.subr.mxu0 %v147
    %355 = vmatpush1.msra.mxu0 %v146
    %356 = vmatprep.subr.mxu0 %v149
    %357 = vmatpush1.msra.mxu0 %v148
    %358 = vmatprep.subr.mxu0 %v151
    %359 = vmatpush1.msra.mxu0 %v150
    %360 = vmatprep.mubr.f32.mxu0 %v281
    %361 = vmatmul.mubr.f32.gmra.mrb[0].mxu0 %v280
    %v362 = vpop.f32.mrb[0].mxu0
    %v363 = vadd.f32 %v289, %v362
    %v364 = vpop.f32.mrb[0].mxu0
    %v365 = vadd.f32 %v293, %v364
    %366 = vmatprep.mubr.f32.mxu0 %v283
    %367 = vmatmul.mubr.f32.gmra.mrb[0].mxu0 %v282
    %v368 = vpop.f32.mrb[0].mxu0
    %v369 = vadd.f32 %v289, %v368
    %v370 = vpop.f32.mrb[0].mxu0
    %v371 = vadd.f32 %v293, %v370
    %372 = vdwg.mxu0
    %v373 = vmax.f32 %v363, 0.0
    %v374 = vmax.f32 %v365, 0.0
    %v375 = vmax.f32 %v369, 0.0
    %v376 = vmax.f32 %v371, 0.0
    %v377 = vld [vmem:[%s6] sm:$0x1]
    %v379 = vlaneseq
    %v380 = vshrl.u32 %v379, 7
    %v381 = vsub.s32 0, %v380
    %v382 = vrot.slane %v377, %v381
    %384 = vmatprep.subr.mxu0 0.0
    %385 = vmatpush1.msra.mxu0 %v152
    %386 = vmatprep.subr.mxu0 0.0
    %387 = vmatpush1.msra.mxu0 %v153
    %388 = vmatprep.subr.mxu0 0.0
    %389 = vmatpush1.msra.mxu0 %v154
    %390 = vmatprep.subr.mxu0 0.0
    %391 = vmatpush1.msra.mxu0 %v155
    %392 = vmatprep.subr.mxu0 0.0
    %393 = vmatpush1.msra.mxu0 %v156
    %394 = vmatprep.subr.mxu0 0.0
    %395 = vmatpush1.msra.mxu0 %v157
    %396 = vmatprep.subr.mxu0 0.0
    %397 = vmatpush1.msra.mxu0 %v158
    %398 = vmatprep.subr.mxu0 0.0
    %399 = vmatpush1.msra.mxu0 %v159
    %400 = vmatprep.subr.mxu0 0.0
    %401 = vmatpush1.msra.mxu0 %v160
    %402 = vmatprep.subr.mxu0 0.0
    %403 = vmatpush1.msra.mxu0 %v161
    %404 = vmatprep.subr.mxu0 0.0
    %405 = vmatpush1.msra.mxu0 %v162
    %406 = vmatprep.subr.mxu0 0.0
    %407 = vmatpush1.msra.mxu0 %v163
    %408 = vmatprep.subr.mxu0 0.0
    %409 = vmatpush1.msra.mxu0 %v164
    %410 = vmatprep.subr.mxu0 0.0
    %411 = vmatpush1.msra.mxu0 %v165
    %412 = vmatprep.subr.mxu0 0.0
    %413 = vmatpush1.msra.mxu0 %v166
    %414 = vmatprep.subr.mxu0 0.0
    %415 = vmatpush1.msra.mxu0 %v167
    %416 = vmatprep.subr.mxu0 0.0
    %417 = vmatpush1.msra.mxu0 %v168
    %418 = vmatprep.subr.mxu0 0.0
    %419 = vmatpush1.msra.mxu0 %v169
    %420 = vmatprep.subr.mxu0 0.0
    %421 = vmatpush1.msra.mxu0 %v170
    %422 = vmatprep.subr.mxu0 0.0
    %423 = vmatpush1.msra.mxu0 %v171
    %424 = vmatprep.subr.mxu0 0.0
    %425 = vmatpush1.msra.mxu0 %v172
    %426 = vmatprep.subr.mxu0 0.0
    %427 = vmatpush1.msra.mxu0 %v173
    %428 = vmatprep.subr.mxu0 0.0
    %429 = vmatpush1.msra.mxu0 %v174
    %430 = vmatprep.subr.mxu0 0.0
    %431 = vmatpush1.msra.mxu0 %v175
    %432 = vmatprep.subr.mxu0 0.0
    %433 = vmatpush1.msra.mxu0 %v176
    %434 = vmatprep.subr.mxu0 0.0
    %435 = vmatpush1.msra.mxu0 %v177
    %436 = vmatprep.subr.mxu0 0.0
    %437 = vmatpush1.msra.mxu0 %v178
    %438 = vmatprep.subr.mxu0 0.0
    %439 = vmatpush1.msra.mxu0 %v179
    %440 = vmatprep.subr.mxu0 0.0
    %441 = vmatpush1.msra.mxu0 %v180
    %442 = vmatprep.subr.mxu0 0.0
    %443 = vmatpush1.msra.mxu0 %v181
    %444 = vmatprep.subr.mxu0 0.0
    %445 = vmatpush1.msra.mxu0 %v182
    %446 = vmatprep.subr.mxu0 0.0
    %447 = vmatpush1.msra.mxu0 %v183
    %448 = vmatprep.mubr.f32.mxu0 %v374
    %449 = vmatmul.mubr.f32.gmra.mrb[0].mxu0 %v373
    %v450 = vpop.f32.mrb[0].mxu0
    %v451 = vadd.f32 %v382, %v450
    %v452 = vpop.f32.mrb[0].mxu0
    %453 = vmatprep.mubr.f32.mxu0 %v376
    %454 = vmatmul.mubr.f32.gmra.mrb[0].mxu0 %v375
    %v455 = vpop.f32.mrb[0].mxu0
    %v456 = vadd.f32 %v382, %v455
    %v457 = vpop.f32.mrb[0].mxu0
    %458 = vdwg.mxu0
    %v459 = vtanh.pop %v451
    %v460 = vtanh.pop %v456
    %461 = vst [vmem:[#allocation10] sm:$0xff] %v459
    %462 = vst [vmem:[#allocation10 + $0x8] sm:$0xff] %v460
    // Predicated region
    $region46: #{tpu_custom_call.1} parent=1 // pred_check
      _
    $region47: #{tpu_custom_call.1} parent=1 // pred_check_branch
      %464 = sbr.rel (0) target = $region49
    $region48: #{tpu_custom_call.1} parent=1 // pred_region
      %s466 = ssub.s32 256, 256
      %467 = vsyncadd [#allocation4], %s466
      %s468 = sshll.u32 [#allocation10], 4
      %s469 = int_to_ptr.vmem [resolvable:$true] %s468
      %474 = dma.vmem_to_hbm [thread:$0]  %s469, 256, %s7, [#allocation4], 128, 128, 8
    $region49: #{tpu_custom_call.1} parent=1 // pred_fallthru
      _
    // Predicated region
    $region50: #{tpu_custom_call.1} parent=1 // pred_check
      _
    $region51: #{tpu_custom_call.1} parent=1 // pred_check_branch
      %476 = sbr.rel (0) target = $region53
    $region52: #{tpu_custom_call.1} parent=1 // pred_region
      %477 = dma.done [#allocation4], 256
    $region53: #{tpu_custom_call.1} parent=1 // pred_fallthru
      _
    %478 = vsyncpa [#allocation3], 1
    %479 = vsyncpa [#allocation6], 1
    %480 = vsyncpa [#allocation9], 1
    %481 = vsyncpa [#allocation4], 1

</llo_original>
